<compile_context>
chip_gen: v6e
topology: v6e:2x2x1
jax: 0.10.0
libtpu: 0.0.40
codegen_flags: <defaults>
</compile_context>

<pallas_src>
import functools

import jax
import jax.numpy as jnp
from jax import lax
from jax.experimental import pallas as pl
from jax.experimental.pallas import tpu as pltpu


_VMEM_BLOCK_BUDGET = 12 * 1024 * 1024   # honest per-grid-step block budget (bytes)
_VMEM_LIMIT = 32 * 1024 * 1024          # explicit scoped-VMEM limit (safe on v5e/v6e/v7x)


# --------------------------------------------------------------------------
# Tiling helpers.
# --------------------------------------------------------------------------
def _round_up(n, m):
    return ((n + m - 1) // m) * m


def _largest_divisor(total, limit, ok):
    for d in range(min(limit, total), 0, -1):
        if total % d == 0 and ok(d):
            return d
    return None


def _pick_row_tile(total, max_rows):
    """Largest divisor of `total` that is a multiple of 8 (or == total) and
    <= max_rows, preferring a split into >= 2 blocks (v7x megacore)."""
    ok = lambda d: d % 8 == 0 or d == total
    cap = min(max_rows, total)
    if total >= 16:
        cap = min(cap, max(8, total // 2))
    d = _largest_divisor(total, cap, ok)
    if d is None:
        d = _largest_divisor(total, min(max_rows, total), ok)
    return total if d is None else d


def _pick_batch_tile(b, max_tb, rows_per_image):
    """Largest divisor tb of b with (tb * rows_per_image) % 8 == 0 (or tb == b)
    and tb <= max_tb, preferring tb <= b//2 so the grid has >= 2 parallel steps."""
    ok = lambda tb: (tb * rows_per_image) % 8 == 0 or tb == b
    cap = max(1, min(max_tb, b // 2)) if b > 1 else 1
    d = _largest_divisor(b, cap, ok)
    if d is None:
        d = _largest_divisor(b, max(1, min(max_tb, b)), ok)
    return b if d is None else d


# --------------------------------------------------------------------------
# Kernel 1: temporal mean over T (row-tiled, f32 VMEM accumulator, bf16 out).
# --------------------------------------------------------------------------
def _tmean_kernel(x_ref, o_ref, acc_ref, *, inv_t):
    # x_ref: (1, bm, N) f32 (timestep t); acc_ref: (bm, N) f32 resident scratch;
    # o_ref: (bm, N) bf16, written once (scale + cast) at the last timestep.
    t = pl.program_id(1)

    @pl.when(t == 0)
    def _():
        acc_ref[...] = x_ref[0]

    @pl.when(t != 0)
    def _():
        acc_ref[...] += x_ref[0]

    @pl.when(t == pl.num_programs(1) - 1)
    def _():
        o_ref[...] = (acc_ref[...] * inv_t).astype(o_ref.dtype)


def temporal_mean(x_tmn):
    """Mean over the leading (time) axis.  x_tmn: (T, M, N) f32 -> (M, N) bf16."""
    T, M, N = x_tmn.shape
    # 2x double-buffered f32 input block + f32 accumulator + 2x bf16 output block.
    per_row = N * (2 * 4 + 4 + 2 * 2)
    bm = _pick_row_tile(M, max(1, (6 * 1024 * 1024) // per_row))
    return pl.pallas_call(
        functools.partial(_tmean_kernel, inv_t=1.0 / T),
        out_shape=jax.ShapeDtypeStruct((M, N), jnp.bfloat16),
        grid=(M // bm, T),                        # reduction axis (T) innermost
        in_specs=[pl.BlockSpec((1, bm, N), lambda i, t: (t, i, 0))],
        out_specs=pl.BlockSpec((bm, N), lambda i, t: (i, 0)),
        scratch_shapes=[pltpu.VMEM((bm, N), jnp.float32)],
        compiler_params=pltpu.CompilerParams(
            dimension_semantics=("parallel", "arbitrary"),
            vmem_limit_bytes=_VMEM_LIMIT),
    )(x_tmn)


# --------------------------------------------------------------------------
# Shared conv body: 3x3 conv (stride 1, pad 1) with folded BN scale, 9 taps.
# The three kw-shifted slabs are built once per block (the only sublane-shifted
# accesses); the kh taps are free major-axis slices of those values.
# --------------------------------------------------------------------------
def _conv9_accumulate(x_ref, w_ref, acc_ref):
    # x_ref: (tb, H+2, W+2, Cin) bf16; w_ref: (9, Cin, Cout) bf16 (kh-major taps);
    # acc_ref: (tb*H*W, Cout) f32, accumulated in place.
    tb, hp, wp, cin = x_ref.shape
    h, w = hp - 2, wp - 2
    m = tb * h * w
    slabs = [x_ref[:, :, kw:kw + w, :] for kw in range(3)]
    for kh in range(3):
        for kw in range(3):
            col = slabs[kw][:, kh:kh + h].reshape(m, cin)
            acc_ref[...] += jnp.dot(col, w_ref[kh * 3 + kw],
                                    preferred_element_type=jnp.float32)


# --------------------------------------------------------------------------
# Kernel 2: Conv1 + folded BN1 + MultiStepLIF + mean_T(spikes), fused.
# Output carries a 1-pixel zero halo so it is directly conv2's padded input.
# --------------------------------------------------------------------------
def _conv1_bn_lif_mean_kernel(x_ref, w_ref, b_ref, o_ref, drive_ref, *,
                              num_steps, tau, v_threshold):
    # x_ref    : (tb, H+2, W+2, Cin)  bf16  padded mean images
    # w_ref    : (9, Cin, Cp)         bf16  conv1 weight, BN1 scale folded in
    # b_ref    : (1, Cp)              f32   folded BN1 bias
    # o_ref    : (tb, H+2, W+2, Cp)   bf16  mean_T(LIF spikes) with zero halo
    # drive_ref: (tb*H*W, Cp)         f32   VMEM scratch (constant LIF drive)
    tb, hp, wp, _ = x_ref.shape
    h, w = hp - 2, wp - 2
    m, cout = drive_ref.shape

    drive_ref[...] = jnp.broadcast_to(b_ref[...], (m, cout))
    _conv9_accumulate(x_ref, w_ref, drive_ref)

    # MultiStepLIF (tau, v_th=1, v_reset=0, hard reset) driven by the same y at
    # every timestep, fused with the temporal mean of its spikes.
    y = drive_ref[...]
    inv_tau = 1.0 / tau

    def step(_, carry):
        v, s = carry
        hmem = v + (y - v) * inv_tau                     # charge (v_reset = 0)
        spk = (hmem >= v_threshold).astype(jnp.float32)  # fire
        return hmem * (1.0 - spk), s + spk               # hard reset, accumulate

    zeros = jnp.zeros_like(y)
    # TODO(synk): for large T the constant-drive spike count has a closed form;
    # the O(T) loop stays because it is VPU filler under the conv's MXU/DMA time.
    _, s = lax.fori_loop(0, num_steps, step, (zeros, zeros),
                         unroll=num_steps <= 8)
    mean_spk = (s * (1.0 / num_steps)).astype(o_ref.dtype)

    # Store with the 1-pixel zero halo in place: this output is conv2's padded
    # input, so no standalone pad pass (extra HBM round trip) is needed.
    o_ref[...] = jnp.zeros_like(o_ref)
    o_ref[:, 1:1 + h, 1:1 + w, :] = mean_spk.reshape(tb, h, w, cout)


def conv1_bn_lif_mean(xp, w9, bias, *, num_steps, tau=2.0, v_threshold=1.0):
    """xp: (B, H+2, W+2, Cin) bf16 padded mean images; w9: (9, Cin, Cp) bf16;
    bias: (1, Cp) f32.  Returns (B, H+2, W+2, Cp) bf16 = mean_T(LIF(BN1(Conv1)))
    with a 1-pixel zero halo."""
    B, Hp, Wp, Cin = xp.shape
    H, W = Hp - 2, Wp - 2
    Cp = w9.shape[-1]
    # Honest per-image VMEM estimate: double-buffered in/out blocks, the three
    # kw-shifted slabs, the f32 drive scratch and the f32 LIF loop carries.
    in_img = Hp * Wp * Cin * 2
    slab_img = 3 * Hp * W * Cin * 2
    out_img = Hp * Wp * Cp * 2
    work_img = 4 * H * W * Cp * 4
    per_img = 2 * in_img + slab_img + 2 * out_img + work_img
    fixed = 2 * (w9.size * 2 + Cp * 4)
    tb = _pick_batch_tile(B, max(1, (_VMEM_BLOCK_BUDGET - fixed) // per_img), H * W)
    return pl.pallas_call(
        functools.partial(_conv1_bn_lif_mean_kernel, num_steps=num_steps,
                          tau=tau, v_threshold=v_threshold),
        out_shape=jax.ShapeDtypeStruct((B, Hp, Wp, Cp), jnp.bfloat16),
        grid=(B // tb,),
        in_specs=[
            pl.BlockSpec((tb, Hp, Wp, Cin), lambda i: (i, 0, 0, 0)),
            pl.BlockSpec((9, Cin, Cp), lambda i: (0, 0, 0)),
            pl.BlockSpec((1, Cp), lambda i: (0, 0)),
        ],
        out_specs=pl.BlockSpec((tb, Hp, Wp, Cp), lambda i: (i, 0, 0, 0)),
        scratch_shapes=[pltpu.VMEM((tb * H * W, Cp), jnp.float32)],
        compiler_params=pltpu.CompilerParams(
            dimension_semantics=("parallel",),
            vmem_limit_bytes=_VMEM_LIMIT),
    )(xp, w9, bias)


# --------------------------------------------------------------------------
# Kernel 3: Conv2 + folded BN2 (accumulates straight into the output block).
# --------------------------------------------------------------------------
def _conv3x3_bn_kernel(x_ref, w_ref, b_ref, o_ref):
    # x_ref: (tb, H+2, W+2, Cin) bf16; w_ref: (9, Cin, Cout) bf16 (BN folded);
    # b_ref: (1, Cout) f32; o_ref: (tb*H*W, Cout) f32 (init with bias, += taps).
    m, cout = o_ref.shape
    o_ref[...] = jnp.broadcast_to(b_ref[...], (m, cout))
    _conv9_accumulate(x_ref, w_ref, o_ref)


def conv3x3_bn(xp, w9, bias):
    """xp: (B, H+2, W+2, Cin) bf16 padded; w9: (9, Cin, Cout) bf16 (BN scale
    folded in); bias: (1, Cout) f32.  Returns (B*H*W, Cout) f32 = BN(conv3x3)."""
    B, Hp, Wp, Cin = xp.shape
    H, W = Hp - 2, Wp - 2
    Cout = w9.shape[-1]
    in_img = Hp * Wp * Cin * 2
    slab_img = 3 * Hp * W * Cin * 2
    out_img = H * W * Cout * 4
    per_img = 2 * in_img + slab_img + 2 * out_img
    fixed = 2 * (w9.size * 2 + Cout * 4)
    tb = _pick_batch_tile(B, max(1, (_VMEM_BLOCK_BUDGET - fixed) // per_img), H * W)
    return pl.pallas_call(
        _conv3x3_bn_kernel,
        out_shape=jax.ShapeDtypeStruct((B * H * W, Cout), jnp.float32),
        grid=(B // tb,),
        in_specs=[
            pl.BlockSpec((tb, Hp, Wp, Cin), lambda i: (i, 0, 0, 0)),
            pl.BlockSpec((9, Cin, Cout), lambda i: (0, 0, 0)),
            pl.BlockSpec((1, Cout), lambda i: (0, 0)),
        ],
        out_specs=pl.BlockSpec((tb * H * W, Cout), lambda i: (i, 0)),
        compiler_params=pltpu.CompilerParams(
            dimension_semantics=("parallel",),
            vmem_limit_bytes=_VMEM_LIMIT),
    )(xp, w9, bias)


# --------------------------------------------------------------------------
# Full forward pass (layout plumbing in plain JAX, hot paths in Pallas).
# --------------------------------------------------------------------------
def appearance_average_forward(x_tbchw, params, hook=None):
    T, B, C, H, W = x_tbchw.shape
    embed_p = params["w2"].shape[-1]
    embed = int(params["embed_dims"])

    # TODO(synk): attention_lif1(x) only feeds `hook` in the reference forward;
    # with hook=None it has no effect on the output and is skipped.
    # attention_maxpool1/2 are defined in the module but never used in forward.

    # 1) Temporal mean on the raw (T, B*C, H*W) layout (no full-T transpose).
    xm = temporal_mean(x_tbchw.reshape(T, B * C, H * W))           # (B*C, H*W) bf16
    # 2) Only the T-x-smaller mean is transposed to channels-last and padded.
    xm_nhwc = jnp.transpose(xm.reshape(B, C, H, W), (0, 2, 3, 1))
    xp1 = jnp.pad(xm_nhwc, ((0, 0), (1, 1), (1, 1), (0, 0)))
    # 3) Conv1 + BN1 + MultiStepLIF + mean_T(spikes), one fused kernel.  Output
    #    already carries conv2's 1-pixel zero halo.
    s_pad = conv1_bn_lif_mean(xp1, params["w1"], params["bias1"], num_steps=T)
    # 4) Conv2 + BN2 applied once to mean_T(spikes):
    #    mean_T(BN2(Conv2(s_t))) == BN2(Conv2(mean_T(s_t)))  (conv linear, BN affine).
    y2 = conv3x3_bn(s_pad, params["w2"], params["bias2"])          # (B*H*W, embed_p) f32
    # 5) Drop the channel padding, back to NCHW, repeat the temporal mean over T.
    out_mean = jnp.transpose(y2.reshape(B, H, W, embed_p)[..., :embed], (0, 3, 1, 2))
    out = jnp.broadcast_to(out_mean[None], (T, B, embed, H, W))
    return out, hook


# --------------------------------------------------------------------------
# Parameter preparation: BN (eval) fold + channel padding + bf16 cast.
# --------------------------------------------------------------------------
def _fold_bn(gamma, beta, mean, var, eps=1e-5):
    scale = gamma * lax.rsqrt(var + eps)
    return scale, beta - mean * scale


def _prep_conv_bn(w_oihw, gamma, beta, running_mean, running_var,
                  eps=1e-5, cin_pad=None):
    """PyTorch-layout (Cout, Cin, 3, 3) conv weight + BatchNorm (eval) stats ->
    ((9, Cin[_pad], Cout_pad) bf16 weight with the BN scale folded in,
     (1, Cout_pad) f32 bias).  Cout is zero-padded to a multiple of 128 so the
    kernel's stores stay lane-dense; padded channels carry zero weight+bias."""
    scale, bias = _fold_bn(gamma, beta, running_mean, running_var, eps)
    cout, cin = int(w_oihw.shape[0]), int(w_oihw.shape[1])
    w9 = jnp.transpose(w_oihw, (2, 3, 1, 0)).reshape(9, cin, cout)   # (kh,kw,ci,co)
    w9 = w9 * scale[None, None, :]
    cout_p = _round_up(cout, 128)
    w9 = jnp.pad(w9, ((0, 0), (0, 0), (0, cout_p - cout)))
    bias_p = jnp.pad(bias, (0, cout_p - cout))
    if cin_pad is not None and cin_pad > cin:
        w9 = jnp.pad(w9, ((0, 0), (0, cin_pad - cin), (0, 0)))
    return w9.astype(jnp.bfloat16), bias_p.astype(jnp.float32).reshape(1, -1)


# --------------------------------------------------------------------------
# Plain-JAX/XLA references (for the correctness checks in __main__).
# --------------------------------------------------------------------------
def _ref_conv_bn(x_nhwc, w9, bias):
    k = w9.reshape(3, 3, w9.shape[1], w9.shape[2])                   # HWIO
    y = lax.conv_general_dilated(
        x_nhwc, k, window_strides=(1, 1), padding="SAME",
        dimension_numbers=("NHWC", "HWIO", "NHWC"),
        preferred_element_type=jnp.float32)
    return y + bias.reshape(1, 1, 1, -1)


def _ref_lif_mean(y, num_steps, tau=2.0, v_threshold=1.0):
    v = jnp.zeros_like(y)
    s = jnp.zeros_like(y)
    for _ in range(num_steps):
        hmem = v + (y - v) / tau
        spk = (hmem >= v_threshold).astype(y.dtype)
        v = hmem * (1.0 - spk)
        s = s + spk
    return s / num_steps


if __name__ == "__main__":
    # Small shapes consistent with the module (in_features -> hidden -> embed).
    T, B, Cin, H, W = 4, 2, 16, 8, 8
    hidden_features, embed_dims = 32, 16

    key = jax.random.PRNGKey(0)
    ks = jax.random.split(key, 11)

    x = jax.random.normal(ks[0], (T, B, Cin, H, W), dtype=jnp.float32)

    # Conv weights (PyTorch layout, kernel_size=3, bias=False), deterministic init.
    w1_t = jax.random.normal(ks[1], (hidden_features, Cin, 3, 3), jnp.float32) \
        * (1.0 / jnp.sqrt(9.0 * Cin))
    w2_t = jax.random.normal(ks[2], (embed_dims, hidden_features, 3, 3), jnp.float32) \
        * (1.0 / jnp.sqrt(9.0 * hidden_features))

    # BatchNorm parameters (inference mode), deterministic init.
    g1 = 1.0 + 0.1 * jax.random.normal(ks[3], (hidden_features,), jnp.float32)
    b1 = 0.1 * jax.random.normal(ks[4], (hidden_features,), jnp.float32)
    m1 = 0.05 * jax.random.normal(ks[5], (hidden_features,), jnp.float32)
    v1 = jax.random.uniform(ks[6], (hidden_features,), jnp.float32, 0.5, 1.5)
    g2 = 1.0 + 0.1 * jax.random.normal(ks[7], (embed_dims,), jnp.float32)
    b2 = 0.1 * jax.random.normal(ks[8], (embed_dims,), jnp.float32)
    m2 = 0.05 * jax.random.normal(ks[9], (embed_dims,), jnp.float32)
    v2 = jax.random.uniform(ks[10], (embed_dims,), jnp.float32, 0.5, 1.5)

    w1, bias1 = _prep_conv_bn(w1_t, g1, b1, m1, v1)
    w2, bias2 = _prep_conv_bn(w2_t, g2, b2, m2, v2, cin_pad=w1.shape[-1])
    params = {"w1": w1, "bias1": bias1, "w2": w2, "bias2": bias2,
              "embed_dims": embed_dims}
    hidden_p, embed_p = w1.shape[-1], w2.shape[-1]

    # ---- full forward ----
    out, hook = appearance_average_forward(x, params, hook=None)
    out = jax.block_until_ready(out)
    assert out.shape == (T, B, embed_dims, H, W), out.shape
    assert out.dtype == jnp.float32
    assert bool(jnp.all(jnp.isfinite(out)))
    # Output is the temporal mean repeated over T -> all timesteps identical.
    assert bool(jnp.allclose(out[0], out[-1]))

    # ---- per-kernel checks against plain-JAX/XLA references ----
    # 1) temporal mean
    xm_k = temporal_mean(x.reshape(T, B * Cin, H * W)).reshape(B, Cin, H, W)
    xm_ref = jnp.mean(x, axis=0)
    assert bool(jnp.allclose(xm_k.astype(jnp.float32), xm_ref, rtol=1e-2, atol=1e-2))
    # 2) conv1 + BN1 + LIF + mean_T(spikes)   (tolerate isolated threshold flips)
    xm_nhwc = jnp.transpose(xm_k, (0, 2, 3, 1))
    xp1 = jnp.pad(xm_nhwc, ((0, 0), (1, 1), (1, 1), (0, 0)))
    s_pad = conv1_bn_lif_mean(xp1, w1, bias1, num_steps=T)
    ref_smean = _ref_lif_mean(_ref_conv_bn(xm_nhwc, w1, bias1), T)
    interior = s_pad[:, 1:H + 1, 1:W + 1, :].astype(jnp.float32)
    mismatch = jnp.mean((jnp.abs(interior - ref_smean) > 1e-2).astype(jnp.float32))
    assert float(mismatch) < 1e-3, float(mismatch)
    halo = jnp.concatenate([s_pad[:, 0].reshape(-1), s_pad[:, -1].reshape(-1),
                            s_pad[:, :, 0].reshape(-1), s_pad[:, :, -1].reshape(-1)])
    assert float(jnp.max(jnp.abs(halo.astype(jnp.float32)))) == 0.0
    # 3) conv2 + BN2 on the kernel's mean spikes
    y2 = conv3x3_bn(s_pad, w2, bias2)
    ref_y2 = _ref_conv_bn(s_pad[:, 1:H + 1, 1:W + 1, :], w2, bias2)
    assert bool(jnp.allclose(y2.reshape(B, H, W, embed_p), ref_y2,
                             rtol=1e-2, atol=2e-2))
    # 4) end-to-end output equals conv2's temporal mean (repeated over T).
    assert bool(jnp.allclose(jnp.transpose(out[0], (0, 2, 3, 1)),
                             y2.reshape(B, H, W, embed_p)[..., :embed_dims],
                             atol=1e-5))
    print("KERNEL_OK")
</pallas_src>

<mosaic_0001>
module attributes {stable_mosaic.version = 11 : i64} {
  func.func @_tmean_kernel(%arg0: i32, %arg1: i32, %arg2: memref<1x16x64xf32, #tpu.memory_space<vmem>>, %arg3: memref<16x64xbf16, #tpu.memory_space<vmem>>, %arg4: memref<16x64xf32, #tpu.memory_space<vmem>>) attributes {dimension_semantics = [#tpu.dimension_semantics<parallel>, #tpu.dimension_semantics<arbitrary>], iteration_bounds = array<i64: 2, 4>, scalar_prefetch = 0 : i64, scratch_operands = 1 : i64, tpu.core_type = #tpu.core_type<tc>, window_params = [{transform_indices = @transform_0, window_bounds = array<i64: 1, 16, 64>}, {transform_indices = @transform_1, window_bounds = array<i64: 16, 64>}]} {
    %c0_i32 = arith.constant 0 : i32
    %0 = arith.cmpi eq, %arg1, %c0_i32 : i32
    %1 = arith.extui %0 : i1 to i32
    %c0_i32_0 = arith.constant 0 : i32
    %2 = arith.cmpi ne, %1, %c0_i32_0 : i32
    scf.if %2 {
      %c0 = arith.constant 0 : index
      %c0_4 = arith.constant 0 : index
      %c0_5 = arith.constant 0 : index
      %9 = vector.load %arg2[%c0, %c0_4, %c0_5] : memref<1x16x64xf32, #tpu.memory_space<vmem>>, vector<1x16x64xf32>
      %10 = vector.shape_cast %9 : vector<1x16x64xf32> to vector<16x64xf32>
      %c0_6 = arith.constant 0 : index
      %c0_7 = arith.constant 0 : index
      %11 = vector.load %arg4[%c0_6, %c0_7] : memref<16x64xf32, #tpu.memory_space<vmem>>, vector<16x64xf32>
      tpu.vector_store %arg4[%c0_6, %c0_7], %10 {strides = array<i32>} : memref<16x64xf32, #tpu.memory_space<vmem>>, vector<16x64xf32>,
    } else {
    }
    %c0_i32_1 = arith.constant 0 : i32
    %3 = arith.cmpi ne, %arg1, %c0_i32_1 : i32
    %4 = arith.extui %3 : i1 to i32
    %c0_i32_2 = arith.constant 0 : i32
    %5 = arith.cmpi ne, %4, %c0_i32_2 : i32
    scf.if %5 {
      %c0 = arith.constant 0 : index
      %c0_4 = arith.constant 0 : index
      %9 = vector.load %arg4[%c0, %c0_4] : memref<16x64xf32, #tpu.memory_space<vmem>>, vector<16x64xf32>
      %c0_5 = arith.constant 0 : index
      %c0_6 = arith.constant 0 : index
      %c0_7 = arith.constant 0 : index
      %10 = vector.load %arg2[%c0_5, %c0_6, %c0_7] : memref<1x16x64xf32, #tpu.memory_space<vmem>>, vector<1x16x64xf32>
      %11 = vector.shape_cast %10 : vector<1x16x64xf32> to vector<16x64xf32>
      %12 = arith.addf %9, %11 : vector<16x64xf32>
      %c0_8 = arith.constant 0 : index
      %c0_9 = arith.constant 0 : index
      %13 = vector.load %arg4[%c0_8, %c0_9] : memref<16x64xf32, #tpu.memory_space<vmem>>, vector<16x64xf32>
      tpu.vector_store %arg4[%c0_8, %c0_9], %12 {strides = array<i32>} : memref<16x64xf32, #tpu.memory_space<vmem>>, vector<16x64xf32>,
    } else {
    }
    %c3_i32 = arith.constant 3 : i32
    %6 = arith.cmpi eq, %arg1, %c3_i32 : i32
    %7 = arith.extui %6 : i1 to i32
    %c0_i32_3 = arith.constant 0 : i32
    %8 = arith.cmpi ne, %7, %c0_i32_3 : i32
    scf.if %8 {
      %c0 = arith.constant 0 : index
      %c0_4 = arith.constant 0 : index
      %9 = vector.load %arg4[%c0, %c0_4] : memref<16x64xf32, #tpu.memory_space<vmem>>, vector<16x64xf32>
      %cst = arith.constant 2.500000e-01 : f32
      %10 = vector.broadcast %cst : f32 to vector<16x64xf32>
      %11 = arith.mulf %9, %10 : vector<16x64xf32>
      %12 = arith.truncf %11 : vector<16x64xf32> to vector<16x64xbf16>
      %c0_5 = arith.constant 0 : index
      %c0_6 = arith.constant 0 : index
      %13 = vector.load %arg3[%c0_5, %c0_6] : memref<16x64xbf16, #tpu.memory_space<vmem>>, vector<16x64xbf16>
      tpu.vector_store %arg3[%c0_5, %c0_6], %12 {strides = array<i32>} : memref<16x64xbf16, #tpu.memory_space<vmem>>, vector<16x64xbf16>,
    } else {
    }
    return
  }
  func.func @transform_0(%arg0: i32, %arg1: i32) -> (i32, i32, i32) {
    %c0_i32 = arith.constant 0 : i32
    %c0_i32_0 = arith.constant 0 : i32
    return %arg1, %arg0, %c0_i32 : i32, i32, i32
  }
  func.func @transform_1(%arg0: i32, %arg1: i32) -> (i32, i32) {
    %c0_i32 = arith.constant 0 : i32
    %c0_i32_0 = arith.constant 0 : i32
    return %arg0, %c0_i32 : i32, i32
  }
}

</mosaic_0001>

<llo_original>
// kernel: tpu_custom_call.1
$region0: #{tpu_custom_call.1}
  #allocation0 [shape = 'u32[]', space=smem, size = 0x4, offset = 0x4, fixed_abs, tag = 'smem constant byte address 0x4 - core index']
  #allocation1 [shape = 'u32[144,128]{1,0:T(1,128)}', space=vmem, size = 0x12000, scoped, tag = 'internal scratch']
  #allocation2 [shape = 'f32[16,64]{1,0:T(8,128)}', space=vmem, size = 0x2000, scoped, tag = 'scratch operand']
  %s0 = inlined_call_operand.hbm [shape: f32[4,32,64], index: 0, kind: input, shape index: {}]
  %s1 = inlined_call_operand.hbm [shape: bf16[32,64], index: 1, kind: output, shape index: {}]
  %s2 = sld [smem:[#allocation0]]
  $region53: #{tpu_custom_call.1} parent=0
    _
  %s4 = ssub.s32 1, %s2
  %s5 = scalar_select 0, %s4, %s2
  $region1: #{tpu_custom_call.1} parent=0
    #allocation3 [shape = 'u8[16384]{0}', space=vmem, size = 0x4000, scoped, tag = 'input window, operand 0']
    #allocation4 [shape = 's32[2]{0}', space=sflag, size = 0x8, scoped, tag = 'scoped memory for tpu_custom_call.1']
    #allocation5 [shape = 's32[2]{0}', space=sflag, size = 0x8, scoped, tag = 'scoped memory for tpu_custom_call.1']
    #allocation6 [shape = 'u8[8192]{0}', space=vmem, size = 0x2000, scoped, tag = 'output window, operand 0']
    %6 = vsyncpa [#allocation4], 0
    %s7 = scalar_lea.sflag [#allocation4], 1
    %8 = vsyncpa %s7, 0
    %9 = vsyncpa [#allocation5], 0
    %s10 = scalar_lea.sflag [#allocation5], 1
    %11 = vsyncpa %s10, 0
    loop: start=0, step=1, limit=10
    $region2: #{tpu_custom_call.1} parent=1 // loop_pre_header
      _
    $region3: #{tpu_custom_call.1} parent=1 // loop_header
      %s13 = sphi 0, %s17
      %p14 = scmp.ge.s32.totalorder %s13, 10
      %s20 = sphi 0, %s32
      %s21 = sphi 0, %s28
      %s22 = sphi 0, %s20
      %s23 = sphi 0, %s21
      %s24 = sphi 0, %s22
      %s25 = sphi 0, %s23
      %s37 = sphi 0, %s39
      %s40 = sphi 0, %s37
      %s41 = sphi 0, %s40
      %s57 = sphi 0, %s41
      %s63 = sphi 0, %s65
      %s66 = sphi 0, %s63
      %s67 = sphi 0, %s66
      %s83 = sphi 0, %s67
    $region4: #{tpu_custom_call.1} parent=1 // loop_header_branch
      %16 = sbr.rel (%p14) target = $region8
    $region5: #{tpu_custom_call.1} parent=1 // loop_body
      %s18 = ssub.s32 %s13, 1
      %s19 = ssub.s32 %s13, 2
      %s26 = sadd.s32 1, %s21
      %p27 = scmp.ge.s32.totalorder %s26, 4
      %s28 = scalar_select %p27, 0, %s26
      %s29 = sadd.s32 1, %s20
      %s30 = scalar_select %p27, %s29, %s20
      %p31 = scmp.ge.s32.totalorder %s30, 2
      %s32 = scalar_select %p31, 0, %s30
      %s33 = ssub.s32 %s21, %s28
      %s34 = ssub.s32 %s20, %s32
      %s35 = sor.u32 %s33, %s34
      %p36 = scmp.eq.s32.totalorder %s35, 0
      %s38 = sadd.s32 %s37, 1
      %s39 = scalar_select %p36, %s37, %s38
      %p42 = pneg %p36
      %p43 = scmp.eq.s32.totalorder %s13, 7
      %p44 = por %p42, %p43
      %p45 = scmp.ne.s32.totalorder %s37, %s40
      %p46 = scmp.eq.s32.totalorder %s13, 0
      %p47 = por %p45, %p46
      %p48 = scmp.ne.s32.totalorder %s37, %s40
      %p49 = scmp.eq.s32.totalorder %s18, 7
      %p50 = por %p48, %p49
      %p51 = scmp.ne.s32.totalorder %s40, %s41
      %p52 = scmp.eq.s32.totalorder %s18, 0
      %p53 = por %p51, %p52
      %p54 = scmp.ne.s32.totalorder %s40, %s41
      %p55 = scmp.eq.s32.totalorder %s19, 7
      %p56 = por %p54, %p55
      %p58 = scmp.ne.s32.totalorder %s41, %s57
      %p59 = scmp.eq.s32.totalorder %s19, 0
      %p60 = por %p58, %p59
      %s61 = ssub.s32 %s20, %s32
      %p62 = scmp.eq.s32.totalorder %s61, 0
      %s64 = sadd.s32 %s63, 1
      %s65 = scalar_select %p62, %s63, %s64
      %p68 = pneg %p62
      %p69 = scmp.eq.s32.totalorder %s13, 7
      %p70 = por %p68, %p69
      %p71 = scmp.ne.s32.totalorder %s63, %s66
      %p72 = scmp.eq.s32.totalorder %s13, 0
      %p73 = por %p71, %p72
      %p74 = scmp.ne.s32.totalorder %s63, %s66
      %p75 = scmp.eq.s32.totalorder %s18, 7
      %p76 = por %p74, %p75
      %p77 = scmp.ne.s32.totalorder %s66, %s67
      %p78 = scmp.eq.s32.totalorder %s18, 0
      %p79 = por %p77, %p78
      %p80 = scmp.ne.s32.totalorder %s66, %s67
      %p81 = scmp.eq.s32.totalorder %s19, 7
      %p82 = por %p80, %p81
      %p84 = scmp.ne.s32.totalorder %s67, %s83
      %p85 = scmp.eq.s32.totalorder %s19, 0
      %p86 = por %p84, %p85
      %p87 = scmp.le.s32.totalorder 1, %s13
      %p88 = scmp.lt.s32.totalorder %s13, 9
      %p89 = pnand %p87, %p88
      %p90 = pneg %p89
      // Predicated region
      $region9: #{tpu_custom_call.1} parent=5 // pred_check
        _
      $region10: #{tpu_custom_call.1} parent=5 // pred_check_branch
        %92 = sbr.rel (%p89) target = $region12
      $region11: #{tpu_custom_call.1} parent=5 // pred_region
        %s93 = ssub.s32 %s13, 1
      $region12: #{tpu_custom_call.1} parent=5 // pred_fallthru
        _
      %p94 = scmp.lt.s32.totalorder %s13, 8
      // Predicated region
      $region13: #{tpu_custom_call.1} parent=5 // pred_check
        %p95 = pneg %p94
      $region14: #{tpu_custom_call.1} parent=5 // pred_check_branch
        %97 = sbr.rel (%p95) target = $region16
      $region15: #{tpu_custom_call.1} parent=5 // pred_region
        // Predicated region
        $region17: #{tpu_custom_call.1} parent=15 // pred_check
          %p98 = pneg %p47
        $region18: #{tpu_custom_call.1} parent=15 // pred_check_branch
          %100 = sbr.rel (%p98) target = $region20
        $region19: #{tpu_custom_call.1} parent=15 // pred_region
          %s101 = sand.u32 %s37, 1
          %s102 = scalar_lea.sflag [#allocation4], %s101
          %s103 = sand.u32 %s37, 1
          %s104 = smul.addr %s103, 16
          %s105 = scalar_lea.vmem [#allocation3], %s104
          %s106 = smul.u32 2, %s20
          %s108 = ssub.s32 256, 256
          %109 = vsyncadd %s102, %s108
          %s110 = smul.addr %s21, 4
          %s111 = sadd.s32 %s106, %s110
          %s112 = smul.addr %s111, 128
          %s113 = scalar_lea.hbm %s0, %s112
          %s114 = sshll.u32 %s105, 4
          %s115 = int_to_ptr.vmem [resolvable:$true] %s114
          %120 = dma.hbm_to_vmem [thread:$0]  %s113, 256, %s115, %s102, 128, 128, 8
        $region20: #{tpu_custom_call.1} parent=15 // pred_fallthru
          _
      $region16: #{tpu_custom_call.1} parent=5 // pred_fallthru
        _
      %p121 = scmp.le.s32.totalorder 1, %s13
      %p122 = scmp.lt.s32.totalorder %s13, 9
      %p123 = pnand %p121, %p122
      %p124 = pneg %p123
      // Predicated region
      $region21: #{tpu_custom_call.1} parent=5 // pred_check
        _
      $region22: #{tpu_custom_call.1} parent=5 // pred_check_branch
        %126 = sbr.rel (%p123) target = $region24
      $region23: #{tpu_custom_call.1} parent=5 // pred_region
        %s127 = ssub.s32 %s13, 1
        %s128 = sand.u32 %s40, 1
        %s129 = scalar_lea.sflag [#allocation4], %s128
        %s130 = sand.u32 %s40, 1
        %s131 = smul.addr %s130, 16
        %s132 = scalar_lea.vmem [#allocation3], %s131
        // Predicated region
        $region25: #{tpu_custom_call.1} parent=23 // pred_check
          %p133 = pneg %p53
        $region26: #{tpu_custom_call.1} parent=23 // pred_check_branch
          %135 = sbr.rel (%p133) target = $region28
        $region27: #{tpu_custom_call.1} parent=23 // pred_region
          %136 = dma.done %s129, 256
        $region28: #{tpu_custom_call.1} parent=23 // pred_fallthru
          _
        %s137 = sand.u32 %s40, 1
        %s138 = scalar_lea.sflag [#allocation4], %s137
        %s139 = sand.u32 %s40, 1
        %s140 = smul.addr %s139, 16
        %s141 = scalar_lea.vmem [#allocation3], %s140
        %p142 = pneg %p53
        %p143 = pneg %p50
        %p144 = pneg %p79
        %p145 = pneg %p76
        %s146 = sand.u32 %s66, 1
        %s147 = scalar_lea.sflag [#allocation5], %s146
        %s148 = sand.u32 %s66, 1
        %s149 = smul.addr %s148, 8
        %s150 = scalar_lea.vmem [#allocation6], %s149
        %s151 = smul.u32 2, %s22
        %s152 = smul.u32 2, %s22
        %p153 = scmp.eq.s32.totalorder %s23, 0
        // Predicated region
        $region29: #{tpu_custom_call.1} parent=23 // pred_check
          %p154 = pneg %p153
        $region30: #{tpu_custom_call.1} parent=23 // pred_check_branch
          %156 = sbr.rel (%p154) target = $region32
        $region31: #{tpu_custom_call.1} parent=23 // pred_region
          %v157 = vld [vmem:[%s132] sm:$0xff]
          %v158 = vld [vmem:[%s132 + $0x8] sm:$0xff]
          %vm159 = vcmask 523264
          %160 = vst.msk [vmem:[#allocation2] sm:$0xff] %vm159, %v157
          %161 = vst.msk [vmem:[#allocation2 + $0x8] sm:$0xff] %vm159, %v158
        $region32: #{tpu_custom_call.1} parent=23 // pred_fallthru
          _
        %p162 = scmp.ne.s32.totalorder %s23, 0
        // Predicated region
        $region33: #{tpu_custom_call.1} parent=23 // pred_check
          %p163 = pneg %p162
        $region34: #{tpu_custom_call.1} parent=23 // pred_check_branch
          %165 = sbr.rel (%p163) target = $region36
        $region35: #{tpu_custom_call.1} parent=23 // pred_region
          %v166 = vld [vmem:[#allocation2] sm:$0xff]
          %v167 = vld [vmem:[#allocation2 + $0x8] sm:$0xff]
          %v168 = vld [vmem:[%s132] sm:$0xff]
          %v169 = vld [vmem:[%s132 + $0x8] sm:$0xff]
          %v170 = vadd.f32 %v166, %v168
          %v171 = vadd.f32 %v167, %v169
          %vm172 = vcmask 523264
          %173 = vst.msk [vmem:[#allocation2] sm:$0xff] %vm172, %v170
          %174 = vst.msk [vmem:[#allocation2 + $0x8] sm:$0xff] %vm172, %v171
        $region36: #{tpu_custom_call.1} parent=23 // pred_fallthru
          _
        %p175 = scmp.eq.s32.totalorder %s23, 3
        // Predicated region
        $region37: #{tpu_custom_call.1} parent=23 // pred_check
          %p176 = pneg %p175
        $region38: #{tpu_custom_call.1} parent=23 // pred_check_branch
          %178 = sbr.rel (%p176) target = $region40
        $region39: #{tpu_custom_call.1} parent=23 // pred_region
          %v179 = vld [vmem:[#allocation2] sm:$0xff]
          %v180 = vld [vmem:[#allocation2 + $0x8] sm:$0xff]
          %v181 = vmul.f32 %v179, 0.25
          %v182 = vmul.f32 %v180, 0.25
          %v183 = vpack.c.bf16 %v182, %v181
          %v185 = vunpack.c.l.b16 %v183
          %v186 = vunpack.c.h.b16 %v183
          %v187 = vpack.c.b16 %v185, %v185
          %v188 = vpack.c.b16 %v186, %v186
          %vm191 = vcmask 519168
          %192 = vst.msk [vmem:[%s150] sm:$0xf] %vm191, %v187
          %193 = vst.msk [vmem:[%s150 + $0x4] sm:$0xf] %vm191, %v188
        $region40: #{tpu_custom_call.1} parent=23 // pred_fallthru
          _
        %s194 = sand.u32 %s66, 1
        %s195 = scalar_lea.sflag [#allocation5], %s194
        %s196 = sand.u32 %s66, 1
        %s197 = smul.addr %s196, 8
        %s198 = scalar_lea.vmem [#allocation6], %s197
        // Predicated region
        $region41: #{tpu_custom_call.1} parent=23 // pred_check
          %p199 = pneg %p76
        $region42: #{tpu_custom_call.1} parent=23 // pred_check_branch
          %201 = sbr.rel (%p199) target = $region44
        $region43: #{tpu_custom_call.1} parent=23 // pred_region
          %s202 = smul.u32 2, %s22
          %s204 = ssub.s32 128, 128
          %205 = vsyncadd %s195, %s204
          %s206 = smul.addr %s202, 64
          %s207 = scalar_lea.hbm %s1, %s206
          %s208 = sshll.u32 %s198, 4
          %s209 = int_to_ptr.vmem [resolvable:$true] %s208
          %214 = dma.vmem_to_hbm [thread:$0]  %s209, 128, %s207, %s195, 64, 64, 4
        $region44: #{tpu_custom_call.1} parent=23 // pred_fallthru
          _
      $region24: #{tpu_custom_call.1} parent=5 // pred_fallthru
        _
      %p215 = scmp.le.s32.totalorder 2, %s13
      // Predicated region
      $region45: #{tpu_custom_call.1} parent=5 // pred_check
        %p216 = pneg %p215
      $region46: #{tpu_custom_call.1} parent=5 // pred_check_branch
        %218 = sbr.rel (%p216) target = $region48
      $region47: #{tpu_custom_call.1} parent=5 // pred_region
        %s219 = ssub.s32 %s13, 2
        // Predicated region
        $region49: #{tpu_custom_call.1} parent=47 // pred_check
          %p220 = pneg %p82
        $region50: #{tpu_custom_call.1} parent=47 // pred_check_branch
          %222 = sbr.rel (%p220) target = $region52
        $region51: #{tpu_custom_call.1} parent=47 // pred_region
          %s223 = sand.u32 %s67, 1
          %s224 = scalar_lea.sflag [#allocation5], %s223
          %s225 = sand.u32 %s67, 1
          %s226 = smul.addr %s225, 8
          %s227 = scalar_lea.vmem [#allocation6], %s226
          %228 = dma.done %s224, 128
        $region52: #{tpu_custom_call.1} parent=47 // pred_fallthru
          _
      $region48: #{tpu_custom_call.1} parent=5 // pred_fallthru
        _
    $region6: #{tpu_custom_call.1} parent=1 // loop_footer
      %s17 = sadd.s32 1, %s13
    $region7: #{tpu_custom_call.1} parent=1 // loop_footer_branch
      %12 = sbr.rel target = $region3
    $region8: #{tpu_custom_call.1} parent=1 // loop_exit
      _
    %229 = vsyncpa [#allocation4], 1
    %s230 = scalar_lea.sflag [#allocation4], 1
    %231 = vsyncpa %s230, 1
    %232 = vsyncpa [#allocation5], 1
    %s233 = scalar_lea.sflag [#allocation5], 1
    %234 = vsyncpa %s233, 1

</llo_original>
